<compile_context>
chip_gen: v5e
topology: v5e:2x2
jax: 0.10.0
libtpu: 0.0.40
codegen_flags: <defaults>
</compile_context>

<pallas_src>
import numpy as np
import jax
import jax.numpy as jnp
from jax.experimental import pallas as pl
from jax.experimental.pallas import tpu as pltpu

N_AUGS = 7  # subsequence, cutout, jitter, scaling, time_warp, window_slice, window_warp


# ----------------------------- Pallas kernel ------------------------------ #
def _mix_kernel(x_ref, noise_ref, xws_ref, xww_ref, ct_ref, cs_ref, o_ref):
    # coeff(b*d, t) = time-dependent part (1, bt) + scale part (br, 1)
    coeff = ct_ref[...] + cs_ref[...]                       # (br, bt) via broadcast
    o_ref[...] = (x_ref[...] * coeff
                  + noise_ref[...] + xws_ref[...] + xww_ref[...])


def _round_up(n, m):
    return ((n + m - 1) // m) * m


def _pad_to(a, shape):
    pads = [(0, s - d) for d, s in zip(a.shape, shape)]
    if any(p[1] for p in pads):
        return jnp.pad(a, pads)
    return a


def _mix_pallas(x2, noise2, xws2, xww2, coeff_t, coeff_s, *,
                block_r=512, block_t=1024):
    """x2/noise2/xws2/xww2: (R, T) f32; coeff_t: (1, T); coeff_s: (R, 1)."""
    R, T = x2.shape
    Rp = _round_up(R, 8)
    Tp = _round_up(T, 128)
    br = min(block_r, Rp)
    bt = min(block_t, Tp)
    Rp = _round_up(Rp, br)
    Tp = _round_up(Tp, bt)

    xp = _pad_to(x2, (Rp, Tp))
    np_ = _pad_to(noise2, (Rp, Tp))
    wsp = _pad_to(xws2, (Rp, Tp))
    wwp = _pad_to(xww2, (Rp, Tp))
    ctp = _pad_to(coeff_t, (1, Tp))
    csp = _pad_to(coeff_s, (Rp, 1))

    grid = (Rp // br, Tp // bt)
    big_spec = pl.BlockSpec((br, bt), lambda i, j: (i, j))

    out = pl.pallas_call(
        _mix_kernel,
        grid=grid,
        in_specs=[
            big_spec,                                    # x
            big_spec,                                    # w2 * noise
            big_spec,                                    # w5 * window_slice(x)
            big_spec,                                    # w6 * window_warp(x)
            pl.BlockSpec((1, bt), lambda i, j: (0, j)),  # time coefficient row
            pl.BlockSpec((br, 1), lambda i, j: (i, 0)),  # scale coefficient col
        ],
        out_specs=big_spec,
        out_shape=jax.ShapeDtypeStruct((Rp, Tp), jnp.float32),
        compiler_params=pltpu.CompilerParams(
            dimension_semantics=("parallel", "parallel"),
            vmem_limit_bytes=48 * 1024 * 1024),
        cost_estimate=pl.CostEstimate(
            flops=5 * Rp * Tp,
            transcendentals=0,
            bytes_accessed=4 * (5 * Rp * Tp + Tp + Rp)),
    )(xp, np_, wsp, wwp, ctp, csp)
    return out[:R, :T]


def autoaug_forward(weight, x, noise, scale, mask_sub_t, mask_cut_t, x_ws, x_ww,
                    *, block_r=512, block_t=1024):
    """Eval-mode AutoAUG forward.  x: (B,T,D); scale: (B,D); masks: (T,)."""
    B, T, D = x.shape
    para0 = jax.nn.softmax(weight.astype(jnp.float32), axis=-1)[0]       # (7,)
    w = [para0[k] for k in range(N_AUGS)]

    # Combined coefficient on x (subsequence, cutout, jitter x-term, scaling,
    # time_warp identity placeholder), split into small broadcastable factors.
    coeff_t = (w[0] * mask_sub_t + w[1] * mask_cut_t + w[2] + w[4])      # (T,)
    coeff_s = w[3] * scale                                               # (B, D)

    # Lane-dense layout: (B, T, D) -> (B*D, T); branch weights fold into the
    # same XLA transpose/copy that produces each array (no extra HBM pass).
    def to2d(a):
        return jnp.transpose(a, (0, 2, 1)).reshape(B * D, T).astype(jnp.float32)

    out2d = _mix_pallas(
        to2d(x),
        to2d(w[2] * noise),
        to2d(w[5] * x_ws),
        to2d(w[6] * x_ww),
        coeff_t.reshape(1, T).astype(jnp.float32),
        coeff_s.reshape(B * D, 1).astype(jnp.float32),
        block_r=block_r, block_t=block_t)

    aug1 = jnp.transpose(out2d.reshape(B, D, T), (0, 2, 1))
    aug2 = x   # PyTorch returns x.clone(); JAX arrays are immutable, so x itself.
    return aug1, aug2


# ------------------------- plain-JAX glue (augs) --------------------------- #
def _linear_interp(arr, out_len):
    """F.interpolate(mode='linear', align_corners=False) on a (C, L) array."""
    _, L = arr.shape
    coords = (jnp.arange(out_len, dtype=jnp.float32) + 0.5) * (L / out_len) - 0.5
    coords = jnp.clip(coords, 0.0, L - 1)
    i0 = jnp.floor(coords).astype(jnp.int32)
    i1 = jnp.minimum(i0 + 1, L - 1)
    wgt = coords - i0.astype(jnp.float32)
    return arr[:, i0] * (1.0 - wgt) + arr[:, i1] * wgt


def window_slice_aug(x, rng, reduce_ratio=0.5):
    B, T, _ = x.shape
    target_len = int(np.ceil(reduce_ratio * T))
    if target_len >= T:
        return x
    starts = rng.randint(0, T - target_len, size=B)
    outs = []
    for i in range(B):
        s = int(starts[i])
        crop = x[i, s:s + target_len, :].T           # (D, target_len)
        outs.append(_linear_interp(crop, T).T)       # (T, D)
    return jnp.stack(outs, 0)


def window_warp_aug(x, rng, window_ratio=0.3, scales=(0.5, 2.0)):
    B, T, _ = x.shape
    warp_scales = rng.choice(scales, B)
    warp_size = int(np.ceil(window_ratio * T))
    starts = rng.randint(1, T - warp_size - 1, size=B)
    ends = starts + warp_size
    outs = []
    for i in range(B):
        s, e = int(starts[i]), int(ends[i])
        xi = x[i].T                                  # (D, T)
        seg = _linear_interp(xi[:, s:e], int(warp_size * warp_scales[i]))
        full = jnp.concatenate([xi[:, :s], seg, xi[:, e:]], axis=-1)
        outs.append(_linear_interp(full, T).T)       # (T, D)
    return jnp.stack(outs, 0)


# --------------------------------- main ------------------------------------ #
if __name__ == "__main__":
    B, T, D = 2, 2048, 8
    key = jax.random.PRNGKey(0)
    k_w, k_x, k_noise, k_scale = jax.random.split(key, 4)

    # nn.Parameter of shape (2, n_augs), init N(0, 0.01)
    weight = (0.01 * jax.random.normal(k_w, (2, N_AUGS))).astype(jnp.float32)
    x = jax.random.normal(k_x, (B, T, D), dtype=jnp.float32)

    rng = np.random.RandomState(0)
    t_idx = np.arange(T)

    # subsequence: keep a random [start, end) window, zero elsewhere
    crop_l = rng.randint(2, T + 1)
    s_start = rng.randint(0, T - crop_l + 1)
    s_end = min(s_start + crop_l, T)
    mask_sub_t = jnp.asarray(((t_idx >= s_start) & (t_idx < s_end)).astype(np.float32))

    # cutout: zero a random [start, end) window of length int(0.1*T)
    win_len = int(0.1 * T)
    c_start = rng.randint(0, T - win_len - 1)
    c_end = min(c_start + win_len, T)
    mask_cut_t = jnp.asarray((~((t_idx >= c_start) & (t_idx < c_end))).astype(np.float32))

    # jitter noise N(0, 0.3) of shape (B,T,D); scaling factor N(1, 0.5) of shape (B,D)
    noise = (0.3 * jax.random.normal(k_noise, (B, T, D))).astype(jnp.float32)
    scale = (1.0 + 0.5 * jax.random.normal(k_scale, (B, D))).astype(jnp.float32)

    # interpolation-based augmentations prepared in plain-JAX glue
    x_ws = window_slice_aug(x, rng)
    x_ww = window_warp_aug(x, rng)

    aug1, aug2 = autoaug_forward(weight, x, noise, scale,
                                 mask_sub_t, mask_cut_t, x_ws, x_ww)
    jax.block_until_ready((aug1, aug2))

    # pure-JAX reference of the same eval-mode forward (x_tw placeholder = x)
    para0 = jax.nn.softmax(weight, axis=-1)[0]
    mask_sub3 = mask_sub_t.reshape(1, T, 1)
    mask_cut3 = mask_cut_t.reshape(1, T, 1)
    scale3 = scale.reshape(B, 1, D)
    xs1 = jnp.stack([x * mask_sub3, x * mask_cut3, x + noise, x * scale3,
                     x, x_ws, x_ww], 0)
    ref1 = jnp.sum(para0[:, None, None, None] * xs1, axis=0)
    np.testing.assert_allclose(np.asarray(aug1), np.asarray(ref1),
                               rtol=1e-5, atol=1e-5)
    np.testing.assert_array_equal(np.asarray(aug2), np.asarray(x))
    print("KERNEL_OK")
</pallas_src>

<mosaic_0001>
module attributes {stable_mosaic.version = 11 : i64} {
  func.func @_mix_kernel(%arg0: i32, %arg1: i32, %arg2: memref<16x1024xf32, #tpu.memory_space<vmem>>, %arg3: memref<16x1024xf32, #tpu.memory_space<vmem>>, %arg4: memref<16x1024xf32, #tpu.memory_space<vmem>>, %arg5: memref<16x1024xf32, #tpu.memory_space<vmem>>, %arg6: memref<1x1024xf32, #tpu.memory_space<vmem>>, %arg7: memref<16x1xf32, #tpu.memory_space<vmem>>, %arg8: memref<16x1024xf32, #tpu.memory_space<vmem>>) attributes {dimension_semantics = [#tpu.dimension_semantics<parallel>, #tpu.dimension_semantics<parallel>], iteration_bounds = array<i64: 1, 2>, scalar_prefetch = 0 : i64, scratch_operands = 0 : i64, tpu.core_type = #tpu.core_type<tc>, window_params = [{transform_indices = @transform_0, window_bounds = array<i64: 16, 1024>}, {transform_indices = @transform_1, window_bounds = array<i64: 16, 1024>}, {transform_indices = @transform_2, window_bounds = array<i64: 16, 1024>}, {transform_indices = @transform_3, window_bounds = array<i64: 16, 1024>}, {transform_indices = @transform_4, window_bounds = array<i64: 1, 1024>}, {transform_indices = @transform_5, window_bounds = array<i64: 16, 1>}, {transform_indices = @transform_6, window_bounds = array<i64: 16, 1024>}]} {
    %c0 = arith.constant 0 : index
    %c0_0 = arith.constant 0 : index
    %0 = vector.load %arg6[%c0, %c0_0] : memref<1x1024xf32, #tpu.memory_space<vmem>>, vector<1x1024xf32>
    %c0_1 = arith.constant 0 : index
    %c0_2 = arith.constant 0 : index
    %1 = vector.load %arg7[%c0_1, %c0_2] : memref<16x1xf32, #tpu.memory_space<vmem>>, vector<16x1xf32>
    %2 = vector.broadcast %0 : vector<1x1024xf32> to vector<16x1024xf32>
    %3 = vector.broadcast %1 : vector<16x1xf32> to vector<16x1024xf32>
    %4 = arith.addf %2, %3 : vector<16x1024xf32>
    %c0_3 = arith.constant 0 : index
    %c0_4 = arith.constant 0 : index
    %5 = vector.load %arg2[%c0_3, %c0_4] : memref<16x1024xf32, #tpu.memory_space<vmem>>, vector<16x1024xf32>
    %6 = arith.mulf %5, %4 : vector<16x1024xf32>
    %c0_5 = arith.constant 0 : index
    %c0_6 = arith.constant 0 : index
    %7 = vector.load %arg3[%c0_5, %c0_6] : memref<16x1024xf32, #tpu.memory_space<vmem>>, vector<16x1024xf32>
    %8 = arith.addf %6, %7 : vector<16x1024xf32>
    %c0_7 = arith.constant 0 : index
    %c0_8 = arith.constant 0 : index
    %9 = vector.load %arg4[%c0_7, %c0_8] : memref<16x1024xf32, #tpu.memory_space<vmem>>, vector<16x1024xf32>
    %10 = arith.addf %8, %9 : vector<16x1024xf32>
    %c0_9 = arith.constant 0 : index
    %c0_10 = arith.constant 0 : index
    %11 = vector.load %arg5[%c0_9, %c0_10] : memref<16x1024xf32, #tpu.memory_space<vmem>>, vector<16x1024xf32>
    %12 = arith.addf %10, %11 : vector<16x1024xf32>
    %c0_11 = arith.constant 0 : index
    %c0_12 = arith.constant 0 : index
    %13 = vector.load %arg8[%c0_11, %c0_12] : memref<16x1024xf32, #tpu.memory_space<vmem>>, vector<16x1024xf32>
    tpu.vector_store %arg8[%c0_11, %c0_12], %12 {strides = array<i32>} : memref<16x1024xf32, #tpu.memory_space<vmem>>, vector<16x1024xf32>,
    return
  }
  func.func @transform_0(%arg0: i32, %arg1: i32) -> (i32, i32) {
    %c0_i32 = arith.constant 0 : i32
    return %arg0, %arg1 : i32, i32
  }
  func.func @transform_1(%arg0: i32, %arg1: i32) -> (i32, i32) {
    %c0_i32 = arith.constant 0 : i32
    return %arg0, %arg1 : i32, i32
  }
  func.func @transform_2(%arg0: i32, %arg1: i32) -> (i32, i32) {
    %c0_i32 = arith.constant 0 : i32
    return %arg0, %arg1 : i32, i32
  }
  func.func @transform_3(%arg0: i32, %arg1: i32) -> (i32, i32) {
    %c0_i32 = arith.constant 0 : i32
    return %arg0, %arg1 : i32, i32
  }
  func.func @transform_4(%arg0: i32, %arg1: i32) -> (i32, i32) {
    %c0_i32 = arith.constant 0 : i32
    %c0_i32_0 = arith.constant 0 : i32
    return %c0_i32, %arg1 : i32, i32
  }
  func.func @transform_5(%arg0: i32, %arg1: i32) -> (i32, i32) {
    %c0_i32 = arith.constant 0 : i32
    %c0_i32_0 = arith.constant 0 : i32
    return %arg0, %c0_i32 : i32, i32
  }
  func.func @transform_6(%arg0: i32, %arg1: i32) -> (i32, i32) {
    %c0_i32 = arith.constant 0 : i32
    return %arg0, %arg1 : i32, i32
  }
}

</mosaic_0001>

<llo_original>
// kernel: tpu_custom_call.1
$region0: #{tpu_custom_call.1}
  #allocation0 [shape = 'u32[]', space=smem, size = 0x4, offset = 0x4, fixed_abs, tag = 'smem constant byte address 0x4 - core index']
  #allocation1 [shape = 'u32[72,128]{1,0:T(1,128)}', space=vmem, size = 0x9000, scoped, tag = 'internal scratch']
  %s0 = inlined_call_operand.hbm [shape: f32[16,2048], index: 0, kind: input, shape index: {}]
  %s1 = inlined_call_operand.hbm [shape: f32[16,2048], index: 1, kind: input, shape index: {}]
  %s2 = inlined_call_operand.hbm [shape: f32[16,2048], index: 2, kind: input, shape index: {}]
  %s3 = inlined_call_operand.hbm [shape: f32[16,2048], index: 3, kind: input, shape index: {}]
  %s4 = inlined_call_operand.vmem [shape: f32[1,2048], index: 4, kind: input, shape index: {}]
  %s5 = inlined_call_operand.vmem [shape: f32[16,1], index: 5, kind: input, shape index: {}]
  %s6 = inlined_call_operand.hbm [shape: f32[16,2048], index: 6, kind: output, shape index: {}]
  %s7 = sld [smem:[#allocation0]]
  $region73: #{tpu_custom_call.1} parent=0
    _
  %s9 = ssub.s32 1, %s7
  %s10 = scalar_select 0, %s9, %s7
  $region1: #{tpu_custom_call.1} parent=0
    #allocation2 [shape = 'u8[131072]{0}', space=vmem, size = 0x20000, scoped, tag = 'input window, operand 0']
    #allocation3 [shape = 's32[2]{0}', space=sflag, size = 0x8, scoped, tag = 'scoped memory for tpu_custom_call.1']
    #allocation4 [shape = 's32[2]{0}', space=sflag, size = 0x8, scoped, tag = 'scoped memory for tpu_custom_call.1']
    #allocation5 [shape = 'u8[131072]{0}', space=vmem, size = 0x20000, scoped, tag = 'input window, operand 1']
    #allocation6 [shape = 's32[2]{0}', space=sflag, size = 0x8, scoped, tag = 'scoped memory for tpu_custom_call.1']
    #allocation7 [shape = 'u8[131072]{0}', space=vmem, size = 0x20000, scoped, tag = 'input window, operand 2']
    #allocation8 [shape = 'u8[131072]{0}', space=vmem, size = 0x20000, scoped, tag = 'input window, operand 3']
    #allocation9 [shape = 's32[2]{0}', space=sflag, size = 0x8, scoped, tag = 'scoped memory for tpu_custom_call.1']
    #allocation10 [shape = 'u8[131072]{0}', space=vmem, size = 0x20000, scoped, tag = 'output window, operand 0']
    %11 = vsyncpa [#allocation3], 0
    %s12 = scalar_lea.sflag [#allocation3], 1
    %13 = vsyncpa %s12, 0
    %14 = vsyncpa [#allocation6], 0
    %s15 = scalar_lea.sflag [#allocation6], 1
    %16 = vsyncpa %s15, 0
    %17 = vsyncpa [#allocation9], 0
    %s18 = scalar_lea.sflag [#allocation9], 1
    %19 = vsyncpa %s18, 0
    %20 = vsyncpa [#allocation4], 0
    %s21 = scalar_lea.sflag [#allocation4], 1
    %22 = vsyncpa %s21, 0
    loop: start=0, step=1, limit=4
    $region2: #{tpu_custom_call.1} parent=1 // loop_pre_header
      _
    $region3: #{tpu_custom_call.1} parent=1 // loop_header
      %s24 = sphi 0, %s28
      %p25 = scmp.ge.s32.totalorder %s24, 4
      %s31 = sphi 0, %s43
      %s32 = sphi 0, %s39
      %s33 = sphi 0, %s31
      %s34 = sphi 0, %s32
      %s35 = sphi 0, %s33
      %s36 = sphi 0, %s34
      %s48 = sphi 0, %s50
      %s51 = sphi 0, %s48
      %s52 = sphi 0, %s51
      %s68 = sphi 0, %s52
      %s76 = sphi 0, %s78
      %s79 = sphi 0, %s76
      %s80 = sphi 0, %s79
      %s96 = sphi 0, %s80
      %s104 = sphi 0, %s106
      %s107 = sphi 0, %s104
      %s108 = sphi 0, %s107
      %s124 = sphi 0, %s108
      %s132 = sphi 0, %s134
      %s135 = sphi 0, %s132
      %s136 = sphi 0, %s135
      %s152 = sphi 0, %s136
      %s158 = sphi 0, %s160
      %s161 = sphi 0, %s158
      %s162 = sphi 0, %s161
      %s178 = sphi 0, %s162
      %s184 = sphi 0, %s186
      %s187 = sphi 0, %s184
      %s188 = sphi 0, %s187
      %s204 = sphi 0, %s188
      %s212 = sphi 0, %s214
      %s215 = sphi 0, %s212
      %s216 = sphi 0, %s215
      %s232 = sphi 0, %s216
    $region4: #{tpu_custom_call.1} parent=1 // loop_header_branch
      %27 = sbr.rel (%p25) target = $region8
    $region5: #{tpu_custom_call.1} parent=1 // loop_body
      %s29 = ssub.s32 %s24, 1
      %s30 = ssub.s32 %s24, 2
      %s37 = sadd.s32 1, %s32
      %p38 = scmp.ge.s32.totalorder %s37, 2
      %s39 = scalar_select %p38, 0, %s37
      %s40 = sadd.s32 1, %s31
      %s41 = scalar_select %p38, %s40, %s31
      %p42 = scmp.ge.s32.totalorder %s41, 1
      %s43 = scalar_select %p42, 0, %s41
      %s44 = ssub.s32 %s31, %s43
      %s45 = ssub.s32 %s32, %s39
      %s46 = sor.u32 %s44, %s45
      %p47 = scmp.eq.s32.totalorder %s46, 0
      %s49 = sadd.s32 %s48, 1
      %s50 = scalar_select %p47, %s48, %s49
      %p53 = pneg %p47
      %p54 = scmp.eq.s32.totalorder %s24, 1
      %p55 = por %p53, %p54
      %p56 = scmp.ne.s32.totalorder %s48, %s51
      %p57 = scmp.eq.s32.totalorder %s24, 0
      %p58 = por %p56, %p57
      %p59 = scmp.ne.s32.totalorder %s48, %s51
      %p60 = scmp.eq.s32.totalorder %s29, 1
      %p61 = por %p59, %p60
      %p62 = scmp.ne.s32.totalorder %s51, %s52
      %p63 = scmp.eq.s32.totalorder %s29, 0
      %p64 = por %p62, %p63
      %p65 = scmp.ne.s32.totalorder %s51, %s52
      %p66 = scmp.eq.s32.totalorder %s30, 1
      %p67 = por %p65, %p66
      %p69 = scmp.ne.s32.totalorder %s52, %s68
      %p70 = scmp.eq.s32.totalorder %s30, 0
      %p71 = por %p69, %p70
      %s72 = ssub.s32 %s31, %s43
      %s73 = ssub.s32 %s32, %s39
      %s74 = sor.u32 %s72, %s73
      %p75 = scmp.eq.s32.totalorder %s74, 0
      %s77 = sadd.s32 %s76, 1
      %s78 = scalar_select %p75, %s76, %s77
      %p81 = pneg %p75
      %p82 = scmp.eq.s32.totalorder %s24, 1
      %p83 = por %p81, %p82
      %p84 = scmp.ne.s32.totalorder %s76, %s79
      %p85 = scmp.eq.s32.totalorder %s24, 0
      %p86 = por %p84, %p85
      %p87 = scmp.ne.s32.totalorder %s76, %s79
      %p88 = scmp.eq.s32.totalorder %s29, 1
      %p89 = por %p87, %p88
      %p90 = scmp.ne.s32.totalorder %s79, %s80
      %p91 = scmp.eq.s32.totalorder %s29, 0
      %p92 = por %p90, %p91
      %p93 = scmp.ne.s32.totalorder %s79, %s80
      %p94 = scmp.eq.s32.totalorder %s30, 1
      %p95 = por %p93, %p94
      %p97 = scmp.ne.s32.totalorder %s80, %s96
      %p98 = scmp.eq.s32.totalorder %s30, 0
      %p99 = por %p97, %p98
      %s100 = ssub.s32 %s31, %s43
      %s101 = ssub.s32 %s32, %s39
      %s102 = sor.u32 %s100, %s101
      %p103 = scmp.eq.s32.totalorder %s102, 0
      %s105 = sadd.s32 %s104, 1
      %s106 = scalar_select %p103, %s104, %s105
      %p109 = pneg %p103
      %p110 = scmp.eq.s32.totalorder %s24, 1
      %p111 = por %p109, %p110
      %p112 = scmp.ne.s32.totalorder %s104, %s107
      %p113 = scmp.eq.s32.totalorder %s24, 0
      %p114 = por %p112, %p113
      %p115 = scmp.ne.s32.totalorder %s104, %s107
      %p116 = scmp.eq.s32.totalorder %s29, 1
      %p117 = por %p115, %p116
      %p118 = scmp.ne.s32.totalorder %s107, %s108
      %p119 = scmp.eq.s32.totalorder %s29, 0
      %p120 = por %p118, %p119
      %p121 = scmp.ne.s32.totalorder %s107, %s108
      %p122 = scmp.eq.s32.totalorder %s30, 1
      %p123 = por %p121, %p122
      %p125 = scmp.ne.s32.totalorder %s108, %s124
      %p126 = scmp.eq.s32.totalorder %s30, 0
      %p127 = por %p125, %p126
      %s128 = ssub.s32 %s31, %s43
      %s129 = ssub.s32 %s32, %s39
      %s130 = sor.u32 %s128, %s129
      %p131 = scmp.eq.s32.totalorder %s130, 0
      %s133 = sadd.s32 %s132, 1
      %s134 = scalar_select %p131, %s132, %s133
      %p137 = pneg %p131
      %p138 = scmp.eq.s32.totalorder %s24, 1
      %p139 = por %p137, %p138
      %p140 = scmp.ne.s32.totalorder %s132, %s135
      %p141 = scmp.eq.s32.totalorder %s24, 0
      %p142 = por %p140, %p141
      %p143 = scmp.ne.s32.totalorder %s132, %s135
      %p144 = scmp.eq.s32.totalorder %s29, 1
      %p145 = por %p143, %p144
      %p146 = scmp.ne.s32.totalorder %s135, %s136
      %p147 = scmp.eq.s32.totalorder %s29, 0
      %p148 = por %p146, %p147
      %p149 = scmp.ne.s32.totalorder %s135, %s136
      %p150 = scmp.eq.s32.totalorder %s30, 1
      %p151 = por %p149, %p150
      %p153 = scmp.ne.s32.totalorder %s136, %s152
      %p154 = scmp.eq.s32.totalorder %s30, 0
      %p155 = por %p153, %p154
      %s156 = ssub.s32 %s32, %s39
      %p157 = scmp.eq.s32.totalorder %s156, 0
      %s159 = sadd.s32 %s158, 1
      %s160 = scalar_select %p157, %s158, %s159
      %p163 = pneg %p157
      %p164 = scmp.eq.s32.totalorder %s24, 1
      %p165 = por %p163, %p164
      %p166 = scmp.ne.s32.totalorder %s158, %s161
      %p167 = scmp.eq.s32.totalorder %s24, 0
      %p168 = por %p166, %p167
      %p169 = scmp.ne.s32.totalorder %s158, %s161
      %p170 = scmp.eq.s32.totalorder %s29, 1
      %p171 = por %p169, %p170
      %p172 = scmp.ne.s32.totalorder %s161, %s162
      %p173 = scmp.eq.s32.totalorder %s29, 0
      %p174 = por %p172, %p173
      %p175 = scmp.ne.s32.totalorder %s161, %s162
      %p176 = scmp.eq.s32.totalorder %s30, 1
      %p177 = por %p175, %p176
      %p179 = scmp.ne.s32.totalorder %s162, %s178
      %p180 = scmp.eq.s32.totalorder %s30, 0
      %p181 = por %p179, %p180
      %s182 = ssub.s32 %s31, %s43
      %p183 = scmp.eq.s32.totalorder %s182, 0
      %s185 = sadd.s32 %s184, 1
      %s186 = scalar_select %p183, %s184, %s185
      %p189 = pneg %p183
      %p190 = scmp.eq.s32.totalorder %s24, 1
      %p191 = por %p189, %p190
      %p192 = scmp.ne.s32.totalorder %s184, %s187
      %p193 = scmp.eq.s32.totalorder %s24, 0
      %p194 = por %p192, %p193
      %p195 = scmp.ne.s32.totalorder %s184, %s187
      %p196 = scmp.eq.s32.totalorder %s29, 1
      %p197 = por %p195, %p196
      %p198 = scmp.ne.s32.totalorder %s187, %s188
      %p199 = scmp.eq.s32.totalorder %s29, 0
      %p200 = por %p198, %p199
      %p201 = scmp.ne.s32.totalorder %s187, %s188
      %p202 = scmp.eq.s32.totalorder %s30, 1
      %p203 = por %p201, %p202
      %p205 = scmp.ne.s32.totalorder %s188, %s204
      %p206 = scmp.eq.s32.totalorder %s30, 0
      %p207 = por %p205, %p206
      %s208 = ssub.s32 %s31, %s43
      %s209 = ssub.s32 %s32, %s39
      %s210 = sor.u32 %s208, %s209
      %p211 = scmp.eq.s32.totalorder %s210, 0
      %s213 = sadd.s32 %s212, 1
      %s214 = scalar_select %p211, %s212, %s213
      %p217 = pneg %p211
      %p218 = scmp.eq.s32.totalorder %s24, 1
      %p219 = por %p217, %p218
      %p220 = scmp.ne.s32.totalorder %s212, %s215
      %p221 = scmp.eq.s32.totalorder %s24, 0
      %p222 = por %p220, %p221
      %p223 = scmp.ne.s32.totalorder %s212, %s215
      %p224 = scmp.eq.s32.totalorder %s29, 1
      %p225 = por %p223, %p224
      %p226 = scmp.ne.s32.totalorder %s215, %s216
      %p227 = scmp.eq.s32.totalorder %s29, 0
      %p228 = por %p226, %p227
      %p229 = scmp.ne.s32.totalorder %s215, %s216
      %p230 = scmp.eq.s32.totalorder %s30, 1
      %p231 = por %p229, %p230
      %p233 = scmp.ne.s32.totalorder %s216, %s232
      %p234 = scmp.eq.s32.totalorder %s30, 0
      %p235 = por %p233, %p234
      %p236 = scmp.le.s32.totalorder 1, %s24
      %p237 = scmp.lt.s32.totalorder %s24, 3
      %p238 = pnand %p236, %p237
      %p239 = pneg %p238
      // Predicated region
      $region9: #{tpu_custom_call.1} parent=5 // pred_check
        _
      $region10: #{tpu_custom_call.1} parent=5 // pred_check_branch
        %241 = sbr.rel (%p238) target = $region12
      $region11: #{tpu_custom_call.1} parent=5 // pred_region
        %s242 = ssub.s32 %s24, 1
        // Predicated region
        $region13: #{tpu_custom_call.1} parent=11 // pred_check
          %p243 = pneg %p200
        $region14: #{tpu_custom_call.1} parent=11 // pred_check_branch
          %245 = sbr.rel (%p243) target = $region16
        $region15: #{tpu_custom_call.1} parent=11 // pred_region
          %s246 = smul.u32 2, %s33
          %p247 = scmp.lt.s32.totalorder %s246, 1
          %s248 = scalar_select %p247, %s246, 1
          %s249 = smul.addr %s248, 8
          %s250 = scalar_lea.vmem %s5, %s249
          %s251 = smul.u32 2, %s33
        $region16: #{tpu_custom_call.1} parent=11 // pred_fallthru
          _
      $region12: #{tpu_custom_call.1} parent=5 // pred_fallthru
        _
      %p252 = scmp.lt.s32.totalorder %s24, 2
      // Predicated region
      $region17: #{tpu_custom_call.1} parent=5 // pred_check
        %p253 = pneg %p252
      $region18: #{tpu_custom_call.1} parent=5 // pred_check_branch
        %255 = sbr.rel (%p253) target = $region20
      $region19: #{tpu_custom_call.1} parent=5 // pred_region
        // Predicated region
        $region21: #{tpu_custom_call.1} parent=19 // pred_check
          %p256 = pneg %p58
        $region22: #{tpu_custom_call.1} parent=19 // pred_check_branch
          %258 = sbr.rel (%p256) target = $region24
        $region23: #{tpu_custom_call.1} parent=19 // pred_region
          %s259 = sand.u32 %s48, 1
          %s260 = scalar_lea.sflag [#allocation3], %s259
          %s261 = sand.u32 %s48, 1
          %s262 = smul.addr %s261, 128
          %s263 = scalar_lea.vmem [#allocation2], %s262
          %s264 = smul.u32 2, %s31
          %s265 = smul.u32 8, %s32
          %267 = vsyncadd %s260, 0
          %s268 = smul.addr %s264, 16
          %s269 = sadd.s32 %s265, %s268
          %s270 = smul.addr %s269, 8
          %s271 = scalar_lea.hbm %s0, %s270
          %s272 = sshll.u32 %s271, 4
          %s273 = int_to_ptr.hbm [resolvable:$true] %s272
          %s274 = sshll.u32 %s263, 4
          %s275 = int_to_ptr.vmem [resolvable:$true] %s274
          %280 = dma.hbm_to_vmem [thread:$0]  %s273, 2048, %s275, %s260, 2048, 1024, 64
        $region24: #{tpu_custom_call.1} parent=19 // pred_fallthru
          _
        // Predicated region
        $region25: #{tpu_custom_call.1} parent=19 // pred_check
          %p281 = pneg %p86
        $region26: #{tpu_custom_call.1} parent=19 // pred_check_branch
          %283 = sbr.rel (%p281) target = $region28
        $region27: #{tpu_custom_call.1} parent=19 // pred_region
          %s284 = sand.u32 %s24, 1
          %s285 = scalar_lea.sflag [#allocation6], %s284
          %s286 = sand.u32 %s76, 1
          %s287 = smul.addr %s286, 128
          %s288 = scalar_lea.vmem [#allocation5], %s287
          %s289 = smul.u32 2, %s31
          %s290 = smul.u32 8, %s32
          %292 = vsyncadd %s285, 0
          %s293 = smul.addr %s289, 16
          %s294 = sadd.s32 %s290, %s293
          %s295 = smul.addr %s294, 8
          %s296 = scalar_lea.hbm %s1, %s295
          %s297 = sshll.u32 %s296, 4
          %s298 = int_to_ptr.hbm [resolvable:$true] %s297
          %s299 = sshll.u32 %s288, 4
          %s300 = int_to_ptr.vmem [resolvable:$true] %s299
          %305 = dma.hbm_to_vmem [thread:$0]  %s298, 2048, %s300, %s285, 2048, 1024, 64
        $region28: #{tpu_custom_call.1} parent=19 // pred_fallthru
          _
        // Predicated region
        $region29: #{tpu_custom_call.1} parent=19 // pred_check
          %p306 = pneg %p114
        $region30: #{tpu_custom_call.1} parent=19 // pred_check_branch
          %308 = sbr.rel (%p306) target = $region32
        $region31: #{tpu_custom_call.1} parent=19 // pred_region
          %s309 = sand.u32 %s24, 1
          %s310 = scalar_lea.sflag [#allocation6], %s309
          %s311 = sand.u32 %s104, 1
          %s312 = smul.addr %s311, 128
          %s313 = scalar_lea.vmem [#allocation7], %s312
          %s314 = smul.u32 2, %s31
          %s315 = smul.u32 8, %s32
          %317 = vsyncadd %s310, 0
          %s318 = smul.addr %s314, 16
          %s319 = sadd.s32 %s315, %s318
          %s320 = smul.addr %s319, 8
          %s321 = scalar_lea.hbm %s2, %s320
          %s322 = sshll.u32 %s321, 4
          %s323 = int_to_ptr.hbm [resolvable:$true] %s322
          %s324 = sshll.u32 %s313, 4
          %s325 = int_to_ptr.vmem [resolvable:$true] %s324
          %330 = dma.hbm_to_vmem [thread:$0]  %s323, 2048, %s325, %s310, 2048, 1024, 64
        $region32: #{tpu_custom_call.1} parent=19 // pred_fallthru
          _
        // Predicated region
        $region33: #{tpu_custom_call.1} parent=19 // pred_check
          %p331 = pneg %p142
        $region34: #{tpu_custom_call.1} parent=19 // pred_check_branch
          %333 = sbr.rel (%p331) target = $region36
        $region35: #{tpu_custom_call.1} parent=19 // pred_region
          %s334 = sand.u32 %s132, 1
          %s335 = scalar_lea.sflag [#allocation9], %s334
          %s336 = sand.u32 %s132, 1
          %s337 = smul.addr %s336, 128
          %s338 = scalar_lea.vmem [#allocation8], %s337
          %s339 = smul.u32 2, %s31
          %s340 = smul.u32 8, %s32
          %342 = vsyncadd %s335, 0
          %s343 = smul.addr %s339, 16
          %s344 = sadd.s32 %s340, %s343
          %s345 = smul.addr %s344, 8
          %s346 = scalar_lea.hbm %s3, %s345
          %s347 = sshll.u32 %s346, 4
          %s348 = int_to_ptr.hbm [resolvable:$true] %s347
          %s349 = sshll.u32 %s338, 4
          %s350 = int_to_ptr.vmem [resolvable:$true] %s349
          %355 = dma.hbm_to_vmem [thread:$0]  %s348, 2048, %s350, %s335, 2048, 1024, 64
        $region36: #{tpu_custom_call.1} parent=19 // pred_fallthru
          _
        // Predicated region
        $region37: #{tpu_custom_call.1} parent=19 // pred_check
          %p356 = pneg %p168
        $region38: #{tpu_custom_call.1} parent=19 // pred_check_branch
          %358 = sbr.rel (%p356) target = $region40
        $region39: #{tpu_custom_call.1} parent=19 // pred_region
          %s359 = smul.u32 8, %s32
          %p360 = scmp.lt.s32.totalorder %s359, 15
          %s361 = scalar_select %p360, %s359, 15
          %s362 = scalar_lea.vmem %s4, %s361
          %s363 = smul.u32 8, %s32
        $region40: #{tpu_custom_call.1} parent=19 // pred_fallthru
          _
      $region20: #{tpu_custom_call.1} parent=5 // pred_fallthru
        _
      %p364 = scmp.le.s32.totalorder 1, %s24
      %p365 = scmp.lt.s32.totalorder %s24, 3
      %p366 = pnand %p364, %p365
      %p367 = pneg %p366
      // Predicated region
      $region41: #{tpu_custom_call.1} parent=5 // pred_check
        _
      $region42: #{tpu_custom_call.1} parent=5 // pred_check_branch
        %369 = sbr.rel (%p366) target = $region44
      $region43: #{tpu_custom_call.1} parent=5 // pred_region
        %s370 = ssub.s32 %s24, 1
        %s371 = sand.u32 %s51, 1
        %s372 = scalar_lea.sflag [#allocation3], %s371
        %s373 = sand.u32 %s51, 1
        %s374 = smul.addr %s373, 128
        %s375 = scalar_lea.vmem [#allocation2], %s374
        // Predicated region
        $region45: #{tpu_custom_call.1} parent=43 // pred_check
          %p376 = pneg %p64
        $region46: #{tpu_custom_call.1} parent=43 // pred_check_branch
          %378 = sbr.rel (%p376) target = $region48
        $region47: #{tpu_custom_call.1} parent=43 // pred_region
          %380 = dma.done %s372, 2048
        $region48: #{tpu_custom_call.1} parent=43 // pred_fallthru
          _
        %s381 = sand.u32 %s29, 1
        %s382 = scalar_lea.sflag [#allocation6], %s381
        %s383 = sand.u32 %s79, 1
        %s384 = smul.addr %s383, 128
        %s385 = scalar_lea.vmem [#allocation5], %s384
        // Predicated region
        $region49: #{tpu_custom_call.1} parent=43 // pred_check
          %p386 = pneg %p92
        $region50: #{tpu_custom_call.1} parent=43 // pred_check_branch
          %388 = sbr.rel (%p386) target = $region52
        $region51: #{tpu_custom_call.1} parent=43 // pred_region
          %390 = dma.done %s382, 2048
        $region52: #{tpu_custom_call.1} parent=43 // pred_fallthru
          _
        %s391 = sand.u32 %s29, 1
        %s392 = scalar_lea.sflag [#allocation6], %s391
        %s393 = sand.u32 %s107, 1
        %s394 = smul.addr %s393, 128
        %s395 = scalar_lea.vmem [#allocation7], %s394
        // Predicated region
        $region53: #{tpu_custom_call.1} parent=43 // pred_check
          %p396 = pneg %p120
        $region54: #{tpu_custom_call.1} parent=43 // pred_check_branch
          %398 = sbr.rel (%p396) target = $region56
        $region55: #{tpu_custom_call.1} parent=43 // pred_region
          %400 = dma.done %s392, 2048
        $region56: #{tpu_custom_call.1} parent=43 // pred_fallthru
          _
        %s401 = sand.u32 %s135, 1
        %s402 = scalar_lea.sflag [#allocation9], %s401
        %s403 = sand.u32 %s135, 1
        %s404 = smul.addr %s403, 128
        %s405 = scalar_lea.vmem [#allocation8], %s404
        // Predicated region
        $region57: #{tpu_custom_call.1} parent=43 // pred_check
          %p406 = pneg %p148
        $region58: #{tpu_custom_call.1} parent=43 // pred_check_branch
          %408 = sbr.rel (%p406) target = $region60
        $region59: #{tpu_custom_call.1} parent=43 // pred_region
          %410 = dma.done %s402, 2048
        $region60: #{tpu_custom_call.1} parent=43 // pred_fallthru
          _
        %s411 = sand.u32 %s51, 1
        %s412 = scalar_lea.sflag [#allocation3], %s411
        %s413 = sand.u32 %s51, 1
        %s414 = smul.addr %s413, 128
        %s415 = scalar_lea.vmem [#allocation2], %s414
        %p416 = pneg %p64
        %p417 = pneg %p61
        %s418 = sand.u32 %s29, 1
        %s419 = scalar_lea.sflag [#allocation6], %s418
        %s420 = sand.u32 %s79, 1
        %s421 = smul.addr %s420, 128
        %s422 = scalar_lea.vmem [#allocation5], %s421
        %p423 = pneg %p92
        %p424 = pneg %p89
        %s425 = sand.u32 %s29, 1
        %s426 = scalar_lea.sflag [#allocation6], %s425
        %s427 = sand.u32 %s107, 1
        %s428 = smul.addr %s427, 128
        %s429 = scalar_lea.vmem [#allocation7], %s428
        %p430 = pneg %p120
        %p431 = pneg %p117
        %s432 = sand.u32 %s135, 1
        %s433 = scalar_lea.sflag [#allocation9], %s432
        %s434 = sand.u32 %s135, 1
        %s435 = smul.addr %s434, 128
        %s436 = scalar_lea.vmem [#allocation8], %s435
        %p437 = pneg %p148
        %p438 = pneg %p145
        %s439 = smul.u32 8, %s34
        %p440 = scmp.lt.s32.totalorder %s439, 15
        %s441 = scalar_select %p440, %s439, 15
        %s442 = scalar_lea.vmem %s4, %s441
        %p443 = pneg %p174
        %p444 = pneg %p171
        %s445 = smul.u32 2, %s33
        %p446 = scmp.lt.s32.totalorder %s445, 1
        %s447 = scalar_select %p446, %s445, 1
        %s448 = smul.addr %s447, 8
        %s449 = scalar_lea.vmem %s5, %s448
        %p450 = pneg %p200
        %p451 = pneg %p197
        %p452 = pneg %p228
        %p453 = pneg %p225
        %s454 = sand.u32 %s215, 1
        %s455 = scalar_lea.sflag [#allocation4], %s454
        %s456 = sand.u32 %s215, 1
        %s457 = smul.addr %s456, 128
        %s458 = scalar_lea.vmem [#allocation10], %s457
        %s459 = smul.u32 2, %s33
        %s460 = smul.u32 8, %s34
        %s461 = smul.u32 2, %s33
        %s462 = smul.u32 8, %s34
        %s463 = smul.u32 2, %s33
        %s464 = smul.u32 8, %s34
        %s465 = smul.u32 2, %s33
        %s466 = smul.u32 8, %s34
        %s467 = smul.u32 8, %s34
        %p468 = scmp.lt.s32.totalorder %s467, 15
        %s469 = scalar_select %p468, %s467, 15
        %s470 = scalar_lea.vmem %s4, %s469
        %s471 = smul.u32 8, %s34
        %s472 = smul.u32 2, %s33
        %p473 = scmp.lt.s32.totalorder %s472, 1
        %s474 = scalar_select %p473, %s472, 1
        %s475 = smul.addr %s474, 8
        %s476 = scalar_lea.vmem %s5, %s475
        %s477 = smul.u32 2, %s33
        %s478 = smul.u32 2, %s33
        %s479 = smul.u32 8, %s34
        %v480 = vld [vmem:[%s470] sm:$0xff]
        %v481 = vld [vmem:[%s476] sm:$0xff]
        %v482 = vld [vmem:[%s476 + $0x8] sm:$0xff]
        %v484 = vperm.slane %v480, 0
        %v485 = vperm.slane %v480, 1
        %v486 = vperm.slane %v480, 2
        %v487 = vperm.slane %v480, 3
        %v488 = vperm.slane %v480, 4
        %v489 = vperm.slane %v480, 5
        %v490 = vperm.slane %v480, 6
        %v491 = vperm.slane %v480, 7
        %501 = vset.pattern.permute.xlu0 0
        %502 = vperm.xlu0 %501, %v481
        %v503 = vpop.permute.xlu0 %502
        %506 = vset.pattern.permute.xlu0 0
        %507 = vperm.xlu0 %506, %v482
        %v508 = vpop.permute.xlu0 %507
        %v510 = vadd.f32 %v484, %v503
        %v511 = vadd.f32 %v485, %v503
        %v512 = vadd.f32 %v486, %v503
        %v513 = vadd.f32 %v487, %v503
        %v514 = vadd.f32 %v488, %v503
        %v515 = vadd.f32 %v489, %v503
        %v516 = vadd.f32 %v490, %v503
        %v517 = vadd.f32 %v491, %v503
        %v518 = vadd.f32 %v484, %v508
        %v519 = vadd.f32 %v485, %v508
        %v520 = vadd.f32 %v486, %v508
        %v521 = vadd.f32 %v487, %v508
        %v522 = vadd.f32 %v488, %v508
        %v523 = vadd.f32 %v489, %v508
        %v524 = vadd.f32 %v490, %v508
        %v525 = vadd.f32 %v491, %v508
        %v526 = vld [vmem:[%s375] sm:$0xff]
        %v527 = vld [vmem:[%s375 + $0x8] sm:$0xff]
        %v528 = vld [vmem:[%s375 + $0x10] sm:$0xff]
        %v529 = vld [vmem:[%s375 + $0x18] sm:$0xff]
        %v530 = vld [vmem:[%s375 + $0x20] sm:$0xff]
        %v531 = vld [vmem:[%s375 + $0x28] sm:$0xff]
        %v532 = vld [vmem:[%s375 + $0x30] sm:$0xff]
        %v533 = vld [vmem:[%s375 + $0x38] sm:$0xff]
        %v534 = vld [vmem:[%s375 + $0x40] sm:$0xff]
        %v535 = vld [vmem:[%s375 + $0x48] sm:$0xff]
        %v536 = vld [vmem:[%s375 + $0x50] sm:$0xff]
        %v537 = vld [vmem:[%s375 + $0x58] sm:$0xff]
        %v538 = vld [vmem:[%s375 + $0x60] sm:$0xff]
        %v539 = vld [vmem:[%s375 + $0x68] sm:$0xff]
        %v540 = vld [vmem:[%s375 + $0x70] sm:$0xff]
        %v541 = vld [vmem:[%s375 + $0x78] sm:$0xff]
        %v542 = vmul.f32 %v526, %v510
        %v543 = vmul.f32 %v527, %v511
        %v544 = vmul.f32 %v528, %v512
        %v545 = vmul.f32 %v529, %v513
        %v546 = vmul.f32 %v530, %v514
        %v547 = vmul.f32 %v531, %v515
        %v548 = vmul.f32 %v532, %v516
        %v549 = vmul.f32 %v533, %v517
        %v550 = vmul.f32 %v534, %v518
        %v551 = vmul.f32 %v535, %v519
        %v552 = vmul.f32 %v536, %v520
        %v553 = vmul.f32 %v537, %v521
        %v554 = vmul.f32 %v538, %v522
        %v555 = vmul.f32 %v539, %v523
        %v556 = vmul.f32 %v540, %v524
        %v557 = vmul.f32 %v541, %v525
        %v558 = vld [vmem:[%s385] sm:$0xff]
        %v559 = vld [vmem:[%s385 + $0x8] sm:$0xff]
        %v560 = vld [vmem:[%s385 + $0x10] sm:$0xff]
        %v561 = vld [vmem:[%s385 + $0x18] sm:$0xff]
        %v562 = vld [vmem:[%s385 + $0x20] sm:$0xff]
        %v563 = vld [vmem:[%s385 + $0x28] sm:$0xff]
        %v564 = vld [vmem:[%s385 + $0x30] sm:$0xff]
        %v565 = vld [vmem:[%s385 + $0x38] sm:$0xff]
        %v566 = vld [vmem:[%s385 + $0x40] sm:$0xff]
        %v567 = vld [vmem:[%s385 + $0x48] sm:$0xff]
        %v568 = vld [vmem:[%s385 + $0x50] sm:$0xff]
        %v569 = vld [vmem:[%s385 + $0x58] sm:$0xff]
        %v570 = vld [vmem:[%s385 + $0x60] sm:$0xff]
        %v571 = vld [vmem:[%s385 + $0x68] sm:$0xff]
        %v572 = vld [vmem:[%s385 + $0x70] sm:$0xff]
        %v573 = vld [vmem:[%s385 + $0x78] sm:$0xff]
        %v574 = vadd.f32 %v542, %v558
        %v575 = vadd.f32 %v543, %v559
        %v576 = vadd.f32 %v544, %v560
        %v577 = vadd.f32 %v545, %v561
        %v578 = vadd.f32 %v546, %v562
        %v579 = vadd.f32 %v547, %v563
        %v580 = vadd.f32 %v548, %v564
        %v581 = vadd.f32 %v549, %v565
        %v582 = vadd.f32 %v550, %v566
        %v583 = vadd.f32 %v551, %v567
        %v584 = vadd.f32 %v552, %v568
        %v585 = vadd.f32 %v553, %v569
        %v586 = vadd.f32 %v554, %v570
        %v587 = vadd.f32 %v555, %v571
        %v588 = vadd.f32 %v556, %v572
        %v589 = vadd.f32 %v557, %v573
        %v590 = vld [vmem:[%s395] sm:$0xff]
        %v591 = vld [vmem:[%s395 + $0x8] sm:$0xff]
        %v592 = vld [vmem:[%s395 + $0x10] sm:$0xff]
        %v593 = vld [vmem:[%s395 + $0x18] sm:$0xff]
        %v594 = vld [vmem:[%s395 + $0x20] sm:$0xff]
        %v595 = vld [vmem:[%s395 + $0x28] sm:$0xff]
        %v596 = vld [vmem:[%s395 + $0x30] sm:$0xff]
        %v597 = vld [vmem:[%s395 + $0x38] sm:$0xff]
        %v598 = vld [vmem:[%s395 + $0x40] sm:$0xff]
        %v599 = vld [vmem:[%s395 + $0x48] sm:$0xff]
        %v600 = vld [vmem:[%s395 + $0x50] sm:$0xff]
        %v601 = vld [vmem:[%s395 + $0x58] sm:$0xff]
        %v602 = vld [vmem:[%s395 + $0x60] sm:$0xff]
        %v603 = vld [vmem:[%s395 + $0x68] sm:$0xff]
        %v604 = vld [vmem:[%s395 + $0x70] sm:$0xff]
        %v605 = vld [vmem:[%s395 + $0x78] sm:$0xff]
        %v606 = vadd.f32 %v574, %v590
        %v607 = vadd.f32 %v575, %v591
        %v608 = vadd.f32 %v576, %v592
        %v609 = vadd.f32 %v577, %v593
        %v610 = vadd.f32 %v578, %v594
        %v611 = vadd.f32 %v579, %v595
        %v612 = vadd.f32 %v580, %v596
        %v613 = vadd.f32 %v581, %v597
        %v614 = vadd.f32 %v582, %v598
        %v615 = vadd.f32 %v583, %v599
        %v616 = vadd.f32 %v584, %v600
        %v617 = vadd.f32 %v585, %v601
        %v618 = vadd.f32 %v586, %v602
        %v619 = vadd.f32 %v587, %v603
        %v620 = vadd.f32 %v588, %v604
        %v621 = vadd.f32 %v589, %v605
        %v622 = vld [vmem:[%s405] sm:$0xff]
        %v623 = vld [vmem:[%s405 + $0x8] sm:$0xff]
        %v624 = vld [vmem:[%s405 + $0x10] sm:$0xff]
        %v625 = vld [vmem:[%s405 + $0x18] sm:$0xff]
        %v626 = vld [vmem:[%s405 + $0x20] sm:$0xff]
        %v627 = vld [vmem:[%s405 + $0x28] sm:$0xff]
        %v628 = vld [vmem:[%s405 + $0x30] sm:$0xff]
        %v629 = vld [vmem:[%s405 + $0x38] sm:$0xff]
        %v630 = vld [vmem:[%s405 + $0x40] sm:$0xff]
        %v631 = vld [vmem:[%s405 + $0x48] sm:$0xff]
        %v632 = vld [vmem:[%s405 + $0x50] sm:$0xff]
        %v633 = vld [vmem:[%s405 + $0x58] sm:$0xff]
        %v634 = vld [vmem:[%s405 + $0x60] sm:$0xff]
        %v635 = vld [vmem:[%s405 + $0x68] sm:$0xff]
        %v636 = vld [vmem:[%s405 + $0x70] sm:$0xff]
        %v637 = vld [vmem:[%s405 + $0x78] sm:$0xff]
        %v638 = vadd.f32 %v606, %v622
        %v639 = vadd.f32 %v607, %v623
        %v640 = vadd.f32 %v608, %v624
        %v641 = vadd.f32 %v609, %v625
        %v642 = vadd.f32 %v610, %v626
        %v643 = vadd.f32 %v611, %v627
        %v644 = vadd.f32 %v612, %v628
        %v645 = vadd.f32 %v613, %v629
        %v646 = vadd.f32 %v614, %v630
        %v647 = vadd.f32 %v615, %v631
        %v648 = vadd.f32 %v616, %v632
        %v649 = vadd.f32 %v617, %v633
        %v650 = vadd.f32 %v618, %v634
        %v651 = vadd.f32 %v619, %v635
        %v652 = vadd.f32 %v620, %v636
        %v653 = vadd.f32 %v621, %v637
        %654 = vst [vmem:[%s458] sm:$0xff] %v638
        %655 = vst [vmem:[%s458 + $0x8] sm:$0xff] %v639
        %656 = vst [vmem:[%s458 + $0x10] sm:$0xff] %v640
        %657 = vst [vmem:[%s458 + $0x18] sm:$0xff] %v641
        %658 = vst [vmem:[%s458 + $0x20] sm:$0xff] %v642
        %659 = vst [vmem:[%s458 + $0x28] sm:$0xff] %v643
        %660 = vst [vmem:[%s458 + $0x30] sm:$0xff] %v644
        %661 = vst [vmem:[%s458 + $0x38] sm:$0xff] %v645
        %662 = vst [vmem:[%s458 + $0x40] sm:$0xff] %v646
        %663 = vst [vmem:[%s458 + $0x48] sm:$0xff] %v647
        %664 = vst [vmem:[%s458 + $0x50] sm:$0xff] %v648
        %665 = vst [vmem:[%s458 + $0x58] sm:$0xff] %v649
        %666 = vst [vmem:[%s458 + $0x60] sm:$0xff] %v650
        %667 = vst [vmem:[%s458 + $0x68] sm:$0xff] %v651
        %668 = vst [vmem:[%s458 + $0x70] sm:$0xff] %v652
        %669 = vst [vmem:[%s458 + $0x78] sm:$0xff] %v653
        %s670 = sand.u32 %s215, 1
        %s671 = scalar_lea.sflag [#allocation4], %s670
        %s672 = sand.u32 %s215, 1
        %s673 = smul.addr %s672, 128
        %s674 = scalar_lea.vmem [#allocation10], %s673
        // Predicated region
        $region61: #{tpu_custom_call.1} parent=43 // pred_check
          %p675 = pneg %p225
        $region62: #{tpu_custom_call.1} parent=43 // pred_check_branch
          %677 = sbr.rel (%p675) target = $region64
        $region63: #{tpu_custom_call.1} parent=43 // pred_region
          %s678 = smul.u32 2, %s33
          %s679 = smul.u32 8, %s34
          %681 = vsyncadd %s671, 0
          %s682 = smul.addr %s678, 16
          %s683 = sadd.s32 %s679, %s682
          %s684 = smul.addr %s683, 8
          %s685 = scalar_lea.hbm %s6, %s684
          %s686 = sshll.u32 %s674, 4
          %s687 = int_to_ptr.vmem [resolvable:$true] %s686
          %s688 = sshll.u32 %s685, 4
          %s689 = int_to_ptr.hbm [resolvable:$true] %s688
          %694 = dma.vmem_to_hbm [thread:$0]  %s687, 2048, %s689, %s671, 1024, 2048, 64
        $region64: #{tpu_custom_call.1} parent=43 // pred_fallthru
          _
      $region44: #{tpu_custom_call.1} parent=5 // pred_fallthru
        _
      %p695 = scmp.le.s32.totalorder 2, %s24
      // Predicated region
      $region65: #{tpu_custom_call.1} parent=5 // pred_check
        %p696 = pneg %p695
      $region66: #{tpu_custom_call.1} parent=5 // pred_check_branch
        %698 = sbr.rel (%p696) target = $region68
      $region67: #{tpu_custom_call.1} parent=5 // pred_region
        %s699 = ssub.s32 %s24, 2
        // Predicated region
        $region69: #{tpu_custom_call.1} parent=67 // pred_check
          %p700 = pneg %p231
        $region70: #{tpu_custom_call.1} parent=67 // pred_check_branch
          %702 = sbr.rel (%p700) target = $region72
        $region71: #{tpu_custom_call.1} parent=67 // pred_region
          %s703 = sand.u32 %s216, 1
          %s704 = scalar_lea.sflag [#allocation4], %s703
          %s705 = sand.u32 %s216, 1
          %s706 = smul.addr %s705, 128
          %s707 = scalar_lea.vmem [#allocation10], %s706
          %709 = dma.done %s704, 2048
        $region72: #{tpu_custom_call.1} parent=67 // pred_fallthru
          _
      $region68: #{tpu_custom_call.1} parent=5 // pred_fallthru
        _
    $region6: #{tpu_custom_call.1} parent=1 // loop_footer
      %s28 = sadd.s32 1, %s24
    $region7: #{tpu_custom_call.1} parent=1 // loop_footer_branch
      %23 = sbr.rel target = $region3
    $region8: #{tpu_custom_call.1} parent=1 // loop_exit
      _
    %710 = vsyncpa [#allocation3], 1
    %s711 = scalar_lea.sflag [#allocation3], 1
    %712 = vsyncpa %s711, 1
    %713 = vsyncpa [#allocation6], 1
    %s714 = scalar_lea.sflag [#allocation6], 1
    %715 = vsyncpa %s714, 1
    %716 = vsyncpa [#allocation9], 1
    %s717 = scalar_lea.sflag [#allocation9], 1
    %718 = vsyncpa %s717, 1
    %719 = vsyncpa [#allocation4], 1
    %s720 = scalar_lea.sflag [#allocation4], 1
    %721 = vsyncpa %s720, 1

</llo_original>
